<compile_context>
chip_gen: v7x
topology: tpu7x:2x2x1
jax: 0.10.0
libtpu: 0.0.40
codegen_flags: <defaults>
</compile_context>

<pallas_src>
import math

import jax
import jax.numpy as jnp
from jax.experimental import pallas as pl
from jax.experimental.pallas import tpu as pltpu

# ----------------------------- config ---------------------------------------
B = 2                       # batch (sequences per tile)
N = 8                       # nodes / sequence length
D = 32                      # embeddings_dimension
NHEADS = 2
HEAD_DIM = D // NHEADS
BN = B * N                  # folded batch*nodes per tile
NHBN = NHEADS * BN          # lane-stacked heads*keys
NUM_TILES = 2               # independent AGT stacks (dg, pt)
NUM_LAYERS = 4              # num_layers in mainModel
TEMPER = 1.0
LN_EPS = 1e-5
LEAKY_SLOPE = 0.01
NEG = -1e9

PROW = 3 * D + 8            # rows per packed layer-parameter slab
LANE_W = 2 * D              # lane width of the layer-parameter slab
LANE_C = max(NHBN, D)       # lane width of the structural-constants slab
CROW = BN + 2 * NHBN        # rows of the structural-constants slab


def _leaky(x):
    return jnp.where(x > 0, x, LEAKY_SLOPE * x)


# ----------------------------- kernel ---------------------------------------
def agt_stack_kernel(h_ref, w_ref, c_ref, out_ref, hcar_ref):
    t = pl.program_id(0)                     # tile / stack index ("parallel")
    l = pl.program_id(1)                     # layer index       ("arbitrary")

    # Load h only for the first layer; afterwards the carry lives in VMEM.
    @pl.when(l == 0)
    def _():
        hcar_ref[...] = h_ref[0].astype(jnp.float32)

    h = hcar_ref[...]                                           # (BN, D)

    # Per-(stack, layer) parameter slab -- the whole (T*L, PROW, LANE_W) slab
    # is VMEM-resident (constant index_map); pick this layer's slice.
    wslab = w_ref[t * NUM_LAYERS + l]                           # (PROW, LANE_W)
    w_lr = wslab[0:D, :]                                        # (D, 2D)  [W_l^T | W_r^T]
    a_el = wslab[D:2 * D, 0:NHBN]                               # (D, NHBN) att_l bcast matrix
    a_r = wslab[D:2 * D, NHBN:NHBN + NHEADS]                    # (D, NHEADS) att_r blockdiag
    w_f = wslab[2 * D:3 * D, 0:D]                               # (D, D)   W_final^T
    ln_w = wslab[3 * D:3 * D + 1, 0:D]                          # (1, D)
    ln_b = wslab[3 * D + 1:3 * D + 2, 0:D]                      # (1, D)

    # Structural constants (resident, layer-independent).
    mask_add = c_ref[0:BN, 0:NHBN]                              # (BN, NHBN) 0 / NEG batch mask
    onesb = c_ref[BN:BN + NHBN, 0:NHBN]                         # (NHBN, NHBN) within-head ones
    colmask = c_ref[BN + NHBN:BN + 2 * NHBN, 0:D]               # (NHBN, D) head column mask

    # Fused left/right input projections: one MXU matmul.
    flr = jnp.dot(h, w_lr, preferred_element_type=jnp.float32)  # (BN, 2D)
    g = _leaky(flr)
    g_l = g[:, 0:D]
    g_r = g[:, D:2 * D]
    fr = flr[:, D:2 * D]

    # Attention logits (1/temper folded into a_el / a_r host-side).
    # el_b[i, h*BN+j] = el[i, h]  (already broadcast over keys by a_el).
    el_b = jnp.dot(g_l, a_el, preferred_element_type=jnp.float32)   # (BN, NHBN)
    er = jnp.dot(g_r, a_r, preferred_element_type=jnp.float32)      # (BN, NHEADS)
    er_t = jnp.transpose(er)                                         # one small XLU transpose
    er_b = jnp.concatenate([er_t[hd:hd + 1, :] for hd in range(NHEADS)],
                           axis=1)                                   # (1, NHBN)

    # Lane-stacked scores for BOTH heads: s[i, h*BN+j] = el[i,h] + er[j,h] + mask.
    s = el_b + er_b + mask_add                                       # (BN, NHBN)

    # Per-head numerically-stable softmax with a single exp / single MXU
    # denominator over the merged slab.
    m_b = jnp.concatenate(
        [jnp.broadcast_to(
            jnp.max(s[:, hd * BN:(hd + 1) * BN], axis=-1, keepdims=True),
            (BN, BN)) for hd in range(NHEADS)],
        axis=1)                                                      # (BN, NHBN)
    p = jnp.exp(s - m_b)
    denom = jnp.dot(p, onesb, preferred_element_type=jnp.float32)    # per-head sums, bcast
    probs = p * pl.reciprocal(denom, approx=True)
    # TODO(synk): att_dropout (dropout1) omitted -- eval-mode identity.

    # Both heads' context in ONE MXU op: (BN, NHBN) @ (NHBN, D).
    fr_stack = jnp.concatenate([fr] * NHEADS, axis=0) * colmask      # (NHBN, D)
    ctx = jnp.dot(probs, fr_stack, preferred_element_type=jnp.float32)  # (BN, D)

    # Final projection.
    fh = jnp.dot(ctx, w_f, preferred_element_type=jnp.float32)       # (BN, D)
    # TODO(synk): emb_dropout (dropout2) omitted -- eval-mode identity.

    # Residual + LayerNorm (one-pass variance).
    res = h + fh
    mean = jnp.mean(res, axis=-1, keepdims=True)
    ex2 = jnp.mean(res * res, axis=-1, keepdims=True)
    var = ex2 - mean * mean
    normed = (res - mean) * jax.lax.rsqrt(var + LN_EPS)
    out = normed * ln_w + ln_b

    hcar_ref[...] = out                                              # layer carry

    @pl.when(l == pl.num_programs(1) - 1)
    def _():
        out_ref[0] = out.astype(out_ref.dtype)


# ----------------------------- wrapper ---------------------------------------
@jax.jit
def agt_stack(h_tiles, w_all, consts):
    return pl.pallas_call(
        agt_stack_kernel,
        out_shape=jax.ShapeDtypeStruct((NUM_TILES, BN, D), h_tiles.dtype),
        grid_spec=pltpu.PrefetchScalarGridSpec(
            num_scalar_prefetch=0,
            grid=(NUM_TILES, NUM_LAYERS),
            in_specs=[
                pl.BlockSpec((1, BN, D), lambda t, l: (t, 0, 0)),      # h tile
                pl.BlockSpec((NUM_TILES * NUM_LAYERS, PROW, LANE_W),
                             lambda t, l: (0, 0, 0)),                  # resident params
                pl.BlockSpec((CROW, LANE_C), lambda t, l: (0, 0)),     # resident consts
            ],
            out_specs=pl.BlockSpec((1, BN, D), lambda t, l: (t, 0, 0)),
            scratch_shapes=[pltpu.VMEM((BN, D), jnp.float32)],         # h carry
        ),
        compiler_params=pltpu.CompilerParams(
            dimension_semantics=("parallel", "arbitrary")),
    )(h_tiles, w_all, consts)


# -------------------------- host-side param packing --------------------------
def xavier_normal(key, out_num, in_num):
    # torch weight shape is (out, in); fan_in=in, fan_out=out, gain=1
    std = math.sqrt(2.0 / (in_num + out_num))
    return std * jax.random.normal(key, (out_num, in_num), dtype=jnp.float32)


def pack_layer_params(w_l, w_r, att_l, att_r, w_f, ln_w, ln_b):
    """One (PROW, LANE_W) slab per AGTLayer:
       rows 0:D        -> [W_l^T | W_r^T]
       rows D:2D       -> [A_EL | A_R | 0]   (temper folded in)
       rows 2D:3D      -> [W_final^T | 0]
       rows 3D, 3D+1   -> LayerNorm weight / bias (padded)."""
    slab = jnp.zeros((PROW, LANE_W), jnp.float32)
    slab = slab.at[0:D, 0:D].set(w_l.T)
    slab = slab.at[0:D, D:2 * D].set(w_r.T)
    for hd in range(NHEADS):
        r0, r1 = D + hd * HEAD_DIM, D + (hd + 1) * HEAD_DIM
        # A_EL[k, hd*BN + j] = att_l[0, k - hd*HD] / temper  (bcast over keys j)
        col_block = jnp.broadcast_to(att_l[0][:, None] / TEMPER, (HEAD_DIM, BN))
        slab = slab.at[r0:r1, hd * BN:(hd + 1) * BN].set(col_block)
        # A_R[k, hd] = att_r[0, k - hd*HD] / temper
        slab = slab.at[r0:r1, NHBN + hd].set(att_r[0] / TEMPER)
    slab = slab.at[2 * D:3 * D, 0:D].set(w_f.T)
    slab = slab.at[3 * D, 0:D].set(ln_w[0])
    slab = slab.at[3 * D + 1, 0:D].set(ln_b[0])
    return slab


def build_consts():
    """Structural constants shared by all layers / tiles."""
    i_idx = jnp.arange(BN)[:, None]
    j_idx = jnp.arange(NHBN)[None, :] % BN
    mask_add = jnp.where((i_idx // N) == (j_idx // N), 0.0, NEG).astype(jnp.float32)

    a_idx = jnp.arange(NHBN)[:, None] // BN
    b_idx = jnp.arange(NHBN)[None, :] // BN
    onesb = (a_idx == b_idx).astype(jnp.float32)

    r_head = jnp.arange(NHBN)[:, None] // BN
    d_head = jnp.arange(D)[None, :] // HEAD_DIM
    colmask = (r_head == d_head).astype(jnp.float32)

    def pad(x):
        return jnp.pad(x, ((0, 0), (0, LANE_C - x.shape[1])))

    return jnp.concatenate([pad(mask_add), pad(onesb), pad(colmask)], axis=0)


# ----------------------- pure-JAX reference (for sanity) ---------------------
def agt_reference_layer(h, wl, wr, attl, attr, wf, ln_w, ln_b):
    bsz = h.shape[0]
    fl = (h @ wl.T).reshape(bsz, -1, NHEADS, HEAD_DIM).transpose(0, 2, 1, 3)
    fr = (h @ wr.T).reshape(bsz, -1, NHEADS, HEAD_DIM).transpose(0, 2, 1, 3)
    el = _leaky(fl) @ attl.T
    er = _leaky(fr) @ attr.T
    score = (el + jnp.swapaxes(er, -1, -2)) / TEMPER
    score = jax.nn.softmax(score, axis=-1)
    ctx = score @ fr
    h_sa = ctx.transpose(0, 2, 1, 3).reshape(bsz, -1, D)
    fh = h_sa @ wf.T
    res = h + fh
    mean = res.mean(-1, keepdims=True)
    var = ((res - mean) ** 2).mean(-1, keepdims=True)
    return (res - mean) / jnp.sqrt(var + LN_EPS) * ln_w[0] + ln_b[0]


# ----------------------------- main ------------------------------------------
if __name__ == "__main__":
    key = jax.random.PRNGKey(0)
    keys = jax.random.split(key, 1 + NUM_TILES * NUM_LAYERS * 5)

    # Independent sequence groups (stand-ins for gh[dg_seqs] / gh[pt_seqs]).
    h_all = jax.random.normal(keys[0], (NUM_TILES, B, N, D), dtype=jnp.float32)

    slabs = []
    ref_params = []                       # [tile][layer] -> param tuple
    kidx = 1
    for t in range(NUM_TILES):
        stack = []
        for l in range(NUM_LAYERS):
            k_wl, k_wr, k_al, k_ar, k_wf = keys[kidx:kidx + 5]
            kidx += 5
            w_l = xavier_normal(k_wl, D, D)               # GT_linear_l_w
            w_r = xavier_normal(k_wr, D, D)               # GT_linear_r_w
            att_l = xavier_normal(k_al, 1, HEAD_DIM)      # GT_att_l
            att_r = xavier_normal(k_ar, 1, HEAD_DIM)      # GT_att_r
            w_f = xavier_normal(k_wf, D, D)               # linear_final
            ln_w = jnp.ones((1, D), jnp.float32)
            ln_b = jnp.zeros((1, D), jnp.float32)
            slabs.append(pack_layer_params(w_l, w_r, att_l, att_r, w_f, ln_w, ln_b))
            stack.append((w_l, w_r, att_l, att_r, w_f, ln_w, ln_b))
        ref_params.append(stack)

    w_all = jnp.stack(slabs, axis=0)                  # (T*L, PROW, LANE_W)
    consts = build_consts()                           # (CROW, LANE_C)
    h_tiles = h_all.reshape(NUM_TILES, BN, D)         # fold batch per tile

    out = agt_stack(h_tiles, w_all, consts)
    out = jax.block_until_ready(out)

    # Reference: loop the pure-JAX layer over each tile's 4-layer stack.
    refs = []
    for t in range(NUM_TILES):
        ht = h_all[t]
        for l in range(NUM_LAYERS):
            ht = agt_reference_layer(ht, *ref_params[t][l])
        refs.append(ht.reshape(BN, D))
    ref = jnp.stack(refs, axis=0)

    # approx=True softmax reciprocal + one-pass LN variance compound over the
    # 4 stacked layers -> compare at a slightly relaxed tolerance.
    assert jnp.allclose(out, ref, atol=1e-2, rtol=1e-2), "mismatch vs reference"

    print("KERNEL_OK")
</pallas_src>

<mosaic_0001>
module attributes {stable_mosaic.version = 11 : i64} {
  func.func @agt_stack_kernel(%arg0: i32, %arg1: i32, %arg2: memref<1x16x32xf32, #tpu.memory_space<vmem>>, %arg3: memref<8x104x64xf32, #tpu.memory_space<vmem>>, %arg4: memref<80x32xf32, #tpu.memory_space<vmem>>, %arg5: memref<1x16x32xf32, #tpu.memory_space<vmem>>, %arg6: memref<16x32xf32, #tpu.memory_space<vmem>>) attributes {dimension_semantics = [#tpu.dimension_semantics<parallel>, #tpu.dimension_semantics<arbitrary>], iteration_bounds = array<i64: 2, 4>, scalar_prefetch = 0 : i64, scratch_operands = 1 : i64, tpu.core_type = #tpu.core_type<tc>, window_params = [{transform_indices = @transform_0, window_bounds = array<i64: 1, 16, 32>}, {pipeline_mode = #tpu.pipeline_mode<synchronous>, transform_indices = @transform_1, window_bounds = array<i64: 8, 104, 64>}, {pipeline_mode = #tpu.pipeline_mode<synchronous>, transform_indices = @transform_2, window_bounds = array<i64: 80, 32>}, {transform_indices = @transform_3, window_bounds = array<i64: 1, 16, 32>}]} {
    %c0_i32 = arith.constant 0 : i32
    %0 = arith.cmpi eq, %arg1, %c0_i32 : i32
    %1 = arith.extui %0 : i1 to i32
    %c0_i32_0 = arith.constant 0 : i32
    %2 = arith.cmpi ne, %1, %c0_i32_0 : i32
    scf.if %2 {
      %c0_25 = arith.constant 0 : index
      %c0_26 = arith.constant 0 : index
      %c0_27 = arith.constant 0 : index
      %83 = vector.load %arg2[%c0_25, %c0_26, %c0_27] : memref<1x16x32xf32, #tpu.memory_space<vmem>>, vector<1x16x32xf32>
      %84 = vector.shape_cast %83 : vector<1x16x32xf32> to vector<16x32xf32>
      %c0_28 = arith.constant 0 : index
      %c0_29 = arith.constant 0 : index
      %85 = vector.load %arg6[%c0_28, %c0_29] : memref<16x32xf32, #tpu.memory_space<vmem>>, vector<16x32xf32>
      tpu.vector_store %arg6[%c0_28, %c0_29], %84 {strides = array<i32>} : memref<16x32xf32, #tpu.memory_space<vmem>>, vector<16x32xf32>,
    } else {
    }
    %c0 = arith.constant 0 : index
    %c0_1 = arith.constant 0 : index
    %3 = vector.load %arg6[%c0, %c0_1] : memref<16x32xf32, #tpu.memory_space<vmem>>, vector<16x32xf32>
    %c4_i32 = arith.constant 4 : i32
    %4 = arith.muli %arg0, %c4_i32 : i32
    %5 = arith.addi %4, %arg1 : i32
    %6 = arith.index_cast %5 : i32 to index
    %c0_2 = arith.constant 0 : index
    %c0_3 = arith.constant 0 : index
    %7 = vector.load %arg3[%6, %c0_2, %c0_3] : memref<8x104x64xf32, #tpu.memory_space<vmem>>, vector<1x104x64xf32>
    %8 = vector.shape_cast %7 : vector<1x104x64xf32> to vector<104x64xf32>
    %9 = vector.extract_strided_slice %8 {offsets = [0, 0], sizes = [32, 64], strides = [1, 1]} : vector<104x64xf32> to vector<32x64xf32>
    %10 = vector.extract_strided_slice %8 {offsets = [32, 0], sizes = [32, 32], strides = [1, 1]} : vector<104x64xf32> to vector<32x32xf32>
    %11 = vector.extract_strided_slice %8 {offsets = [32, 32], sizes = [32, 2], strides = [1, 1]} : vector<104x64xf32> to vector<32x2xf32>
    %12 = vector.extract_strided_slice %8 {offsets = [64, 0], sizes = [32, 32], strides = [1, 1]} : vector<104x64xf32> to vector<32x32xf32>
    %13 = vector.extract_strided_slice %8 {offsets = [96, 0], sizes = [1, 32], strides = [1, 1]} : vector<104x64xf32> to vector<1x32xf32>
    %14 = vector.extract_strided_slice %8 {offsets = [97, 0], sizes = [1, 32], strides = [1, 1]} : vector<104x64xf32> to vector<1x32xf32>
    %c0_4 = arith.constant 0 : index
    %c0_5 = arith.constant 0 : index
    %15 = vector.load %arg4[%c0_4, %c0_5] : memref<80x32xf32, #tpu.memory_space<vmem>>, vector<16x32xf32>
    %c16 = arith.constant 16 : index
    %c0_6 = arith.constant 0 : index
    %16 = vector.load %arg4[%c16, %c0_6] : memref<80x32xf32, #tpu.memory_space<vmem>>, vector<32x32xf32>
    %c48 = arith.constant 48 : index
    %c0_7 = arith.constant 0 : index
    %17 = vector.load %arg4[%c48, %c0_7] : memref<80x32xf32, #tpu.memory_space<vmem>>, vector<32x32xf32>
    %cst = arith.constant dense<0.000000e+00> : vector<16x64xf32>
    %18 = tpu.matmul %3, %9, %cst {dimension_numbers = #tpu.dot_dimension_numbers<[1], [0], [0], [1], [0, 0, 1, 1], [], []>} : vector<16x32xf32>, vector<32x64xf32>, vector<16x64xf32> -> vector<16x64xf32>
    %cst_8 = arith.constant 0.000000e+00 : f32
    %19 = vector.broadcast %cst_8 : f32 to vector<16x64xf32>
    %20 = arith.cmpf ogt, %18, %19 : vector<16x64xf32>
    %cst_9 = arith.constant 0.00999999977 : f32
    %21 = vector.broadcast %cst_9 : f32 to vector<16x64xf32>
    %22 = arith.mulf %21, %18 : vector<16x64xf32>
    %23 = arith.select %20, %18, %22 : vector<16x64xi1>, vector<16x64xf32>
    %24 = vector.extract_strided_slice %23 {offsets = [0, 0], sizes = [16, 32], strides = [1, 1]} : vector<16x64xf32> to vector<16x32xf32>
    %25 = vector.extract_strided_slice %23 {offsets = [0, 32], sizes = [16, 32], strides = [1, 1]} : vector<16x64xf32> to vector<16x32xf32>
    %26 = vector.extract_strided_slice %18 {offsets = [0, 32], sizes = [16, 32], strides = [1, 1]} : vector<16x64xf32> to vector<16x32xf32>
    %cst_10 = arith.constant dense<0.000000e+00> : vector<16x32xf32>
    %27 = tpu.matmul %24, %10, %cst_10 {dimension_numbers = #tpu.dot_dimension_numbers<[1], [0], [0], [1], [0, 0, 1, 1], [], []>} : vector<16x32xf32>, vector<32x32xf32>, vector<16x32xf32> -> vector<16x32xf32>
    %cst_11 = arith.constant dense<0.000000e+00> : vector<16x2xf32>
    %28 = tpu.matmul %25, %11, %cst_11 {dimension_numbers = #tpu.dot_dimension_numbers<[1], [0], [0], [1], [0, 0, 1, 1], [], []>} : vector<16x32xf32>, vector<32x2xf32>, vector<16x2xf32> -> vector<16x2xf32>
    %29 = tpu.transpose %28, [1, 0] : vector<16x2xf32> -> vector<2x16xf32>
    %30 = vector.extract_strided_slice %29 {offsets = [0, 0], sizes = [1, 16], strides = [1, 1]} : vector<2x16xf32> to vector<1x16xf32>
    %31 = vector.extract_strided_slice %29 {offsets = [1, 0], sizes = [1, 16], strides = [1, 1]} : vector<2x16xf32> to vector<1x16xf32>
    %32 = tpu.concatenate %30, %31 in 1 : vector<1x16xf32>, vector<1x16xf32> -> vector<1x32xf32>
    %33 = vector.broadcast %32 : vector<1x32xf32> to vector<16x32xf32>
    %34 = arith.addf %27, %33 : vector<16x32xf32>
    %35 = arith.addf %34, %15 : vector<16x32xf32>
    %36 = vector.extract_strided_slice %35 {offsets = [0, 0], sizes = [16, 16], strides = [1, 1]} : vector<16x32xf32> to vector<16x16xf32>
    %cst_12 = arith.constant dense<0xFF800000> : vector<16xf32>
    %37 = vector.multi_reduction <maximumf>, %36, %cst_12 [1] : vector<16x16xf32> to vector<16xf32>
    %38 = vector.shape_cast %37 : vector<16xf32> to vector<16x1xf32>
    %39 = vector.shape_cast %38 : vector<16x1xf32> to vector<16x1xf32>
    %40 = vector.broadcast %39 : vector<16x1xf32> to vector<16x16xf32>
    %41 = vector.extract_strided_slice %35 {offsets = [0, 16], sizes = [16, 16], strides = [1, 1]} : vector<16x32xf32> to vector<16x16xf32>
    %cst_13 = arith.constant dense<0xFF800000> : vector<16xf32>
    %42 = vector.multi_reduction <maximumf>, %41, %cst_13 [1] : vector<16x16xf32> to vector<16xf32>
    %43 = vector.shape_cast %42 : vector<16xf32> to vector<16x1xf32>
    %44 = vector.shape_cast %43 : vector<16x1xf32> to vector<16x1xf32>
    %45 = vector.broadcast %44 : vector<16x1xf32> to vector<16x16xf32>
    %46 = tpu.concatenate %40, %45 in 1 : vector<16x16xf32>, vector<16x16xf32> -> vector<16x32xf32>
    %47 = arith.subf %35, %46 : vector<16x32xf32>
    %48 = math.exp %47 : vector<16x32xf32>
    %cst_14 = arith.constant dense<0.000000e+00> : vector<16x32xf32>
    %49 = tpu.matmul %48, %16, %cst_14 {dimension_numbers = #tpu.dot_dimension_numbers<[1], [0], [0], [1], [0, 0, 1, 1], [], []>} : vector<16x32xf32>, vector<32x32xf32>, vector<16x32xf32> -> vector<16x32xf32>
    %50 = tpu.reciprocal %49 {approx = true} : vector<16x32xf32> -> vector<16x32xf32>
    %51 = arith.mulf %48, %50 : vector<16x32xf32>
    %52 = tpu.concatenate %26, %26 in 0 : vector<16x32xf32>, vector<16x32xf32> -> vector<32x32xf32>
    %53 = arith.mulf %52, %17 : vector<32x32xf32>
    %cst_15 = arith.constant dense<0.000000e+00> : vector<16x32xf32>
    %54 = tpu.matmul %51, %53, %cst_15 {dimension_numbers = #tpu.dot_dimension_numbers<[1], [0], [0], [1], [0, 0, 1, 1], [], []>} : vector<16x32xf32>, vector<32x32xf32>, vector<16x32xf32> -> vector<16x32xf32>
    %cst_16 = arith.constant dense<0.000000e+00> : vector<16x32xf32>
    %55 = tpu.matmul %54, %12, %cst_16 {dimension_numbers = #tpu.dot_dimension_numbers<[1], [0], [0], [1], [0, 0, 1, 1], [], []>} : vector<16x32xf32>, vector<32x32xf32>, vector<16x32xf32> -> vector<16x32xf32>
    %56 = arith.addf %3, %55 : vector<16x32xf32>
    %cst_17 = arith.constant dense<0.000000e+00> : vector<16xf32>
    %57 = vector.multi_reduction <add>, %56, %cst_17 [1] : vector<16x32xf32> to vector<16xf32>
    %58 = vector.shape_cast %57 : vector<16xf32> to vector<16x1xf32>
    %cst_18 = arith.constant 3.200000e+01 : f32
    %59 = vector.broadcast %cst_18 : f32 to vector<16x1xf32>
    %60 = arith.divf %58, %59 : vector<16x1xf32>
    %61 = arith.mulf %56, %56 : vector<16x32xf32>
    %cst_19 = arith.constant dense<0.000000e+00> : vector<16xf32>
    %62 = vector.multi_reduction <add>, %61, %cst_19 [1] : vector<16x32xf32> to vector<16xf32>
    %63 = vector.shape_cast %62 : vector<16xf32> to vector<16x1xf32>
    %cst_20 = arith.constant 3.200000e+01 : f32
    %64 = vector.broadcast %cst_20 : f32 to vector<16x1xf32>
    %65 = arith.divf %63, %64 : vector<16x1xf32>
    %66 = arith.mulf %60, %60 : vector<16x1xf32>
    %67 = arith.subf %65, %66 : vector<16x1xf32>
    %68 = vector.broadcast %60 : vector<16x1xf32> to vector<16x32xf32>
    %69 = arith.subf %56, %68 : vector<16x32xf32>
    %cst_21 = arith.constant 9.99999974E-6 : f32
    %70 = vector.broadcast %cst_21 : f32 to vector<16x1xf32>
    %71 = arith.addf %67, %70 : vector<16x1xf32>
    %72 = math.rsqrt %71 : vector<16x1xf32>
    %73 = vector.broadcast %72 : vector<16x1xf32> to vector<16x32xf32>
    %74 = arith.mulf %69, %73 : vector<16x32xf32>
    %75 = vector.broadcast %13 : vector<1x32xf32> to vector<16x32xf32>
    %76 = arith.mulf %74, %75 : vector<16x32xf32>
    %77 = vector.broadcast %14 : vector<1x32xf32> to vector<16x32xf32>
    %78 = arith.addf %76, %77 : vector<16x32xf32>
    %c0_22 = arith.constant 0 : index
    %c0_23 = arith.constant 0 : index
    %79 = vector.load %arg6[%c0_22, %c0_23] : memref<16x32xf32, #tpu.memory_space<vmem>>, vector<16x32xf32>
    tpu.vector_store %arg6[%c0_22, %c0_23], %78 {strides = array<i32>} : memref<16x32xf32, #tpu.memory_space<vmem>>, vector<16x32xf32>,
    %c3_i32 = arith.constant 3 : i32
    %80 = arith.cmpi eq, %arg1, %c3_i32 : i32
    %81 = arith.extui %80 : i1 to i32
    %c0_i32_24 = arith.constant 0 : i32
    %82 = arith.cmpi ne, %81, %c0_i32_24 : i32
    scf.if %82 {
      %c0_25 = arith.constant 0 : index
      %c0_26 = arith.constant 0 : index
      %c0_27 = arith.constant 0 : index
      %83 = vector.load %arg5[%c0_25, %c0_26, %c0_27] : memref<1x16x32xf32, #tpu.memory_space<vmem>>, vector<1x16x32xf32>
      %84 = vector.shape_cast %83 : vector<1x16x32xf32> to vector<16x32xf32>
      %85 = vector.shape_cast %78 : vector<16x32xf32> to vector<1x16x32xf32>
      tpu.vector_store %arg5[%c0_25, %c0_26, %c0_27], %85 {strides = array<i32>} : memref<1x16x32xf32, #tpu.memory_space<vmem>>, vector<1x16x32xf32>,
    } else {
    }
    return
  }
  func.func @transform_0(%arg0: i32, %arg1: i32) -> (i32, i32, i32) {
    %c0_i32 = arith.constant 0 : i32
    %c0_i32_0 = arith.constant 0 : i32
    %c0_i32_1 = arith.constant 0 : i32
    return %arg0, %c0_i32, %c0_i32_0 : i32, i32, i32
  }
  func.func @transform_1(%arg0: i32, %arg1: i32) -> (i32, i32, i32) {
    %c0_i32 = arith.constant 0 : i32
    %c0_i32_0 = arith.constant 0 : i32
    %c0_i32_1 = arith.constant 0 : i32
    %c0_i32_2 = arith.constant 0 : i32
    return %c0_i32, %c0_i32_0, %c0_i32_1 : i32, i32, i32
  }
  func.func @transform_2(%arg0: i32, %arg1: i32) -> (i32, i32) {
    %c0_i32 = arith.constant 0 : i32
    %c0_i32_0 = arith.constant 0 : i32
    %c0_i32_1 = arith.constant 0 : i32
    return %c0_i32, %c0_i32_0 : i32, i32
  }
  func.func @transform_3(%arg0: i32, %arg1: i32) -> (i32, i32, i32) {
    %c0_i32 = arith.constant 0 : i32
    %c0_i32_0 = arith.constant 0 : i32
    %c0_i32_1 = arith.constant 0 : i32
    return %arg0, %c0_i32, %c0_i32_0 : i32, i32, i32
  }
}

</mosaic_0001>

<llo_original>
// kernel: agt_stack.1
$region0: #{agt_stack.1}
  #allocation0 [shape = 'u32[]', space=smem, size = 0x4, offset = 0x4, fixed_abs, tag = 'smem constant byte address 0x4 - core index']
  #allocation1 [shape = 'u32[144,128]{1,0:T(1,128)}', space=vmem, size = 0x12000, scoped, tag = 'internal scratch']
  #allocation2 [shape = 'f32[16,32]{1,0:T(8,128)}', space=vmem, size = 0x2000, scoped, tag = 'scratch operand']
  %s0 = inlined_call_operand.vmem [shape: f32[2,16,32], index: 0, kind: input, shape index: {}]
  %s1 = inlined_call_operand.vmem [shape: f32[8,104,64], index: 1, kind: input, shape index: {}]
  %s2 = inlined_call_operand.vmem [shape: f32[80,32], index: 2, kind: input, shape index: {}]
  %s3 = inlined_call_operand.hbm [shape: f32[2,16,32], index: 3, kind: output, shape index: {}]
  %s4 = sld [smem:[#allocation0]]
  $region53: #{agt_stack.1} parent=0
    _
  %s6 = ssub.s32 1, %s4
  %s7 = scalar_select 0, %s6, %s4
  $region1: #{agt_stack.1} parent=0
    #allocation3 [shape = 'u8[16384]{0}', space=vmem, size = 0x4000, scoped, tag = 'output window, operand 0']
    #allocation4 [shape = 's32[2]{0}', space=sflag, size = 0x8, scoped, tag = 'scoped memory for agt_stack.1']
    %8 = vsyncpa [#allocation4], 0
    %s9 = scalar_lea.sflag [#allocation4], 1
    %10 = vsyncpa %s9, 0
    loop: start=0, step=1, limit=10
    $region2: #{agt_stack.1} parent=1 // loop_pre_header
      _
    $region3: #{agt_stack.1} parent=1 // loop_header
      %s12 = sphi 0, %s16
      %p13 = scmp.ge.s32.totalorder %s12, 10
      %s19 = sphi 0, %s31
      %s20 = sphi 0, %s27
      %s21 = sphi 0, %s19
      %s22 = sphi 0, %s20
      %s23 = sphi 0, %s21
      %s24 = sphi 0, %s22
      %s34 = sphi 0, %s36
      %s37 = sphi 0, %s34
      %s38 = sphi 0, %s37
      %s54 = sphi 0, %s38
      %s58 = sphi 0, %s58
      %s60 = sphi 0, %s58
      %s61 = sphi 0, %s60
      %s75 = sphi 0, %s61
      %s79 = sphi 0, %s79
      %s81 = sphi 0, %s79
      %s82 = sphi 0, %s81
      %s96 = sphi 0, %s82
      %s102 = sphi 0, %s104
      %s105 = sphi 0, %s102
      %s106 = sphi 0, %s105
      %s122 = sphi 0, %s106
    $region4: #{agt_stack.1} parent=1 // loop_header_branch
      %15 = sbr.rel (%p13) target = $region8
    $region5: #{agt_stack.1} parent=1 // loop_body
      %s17 = ssub.s32 %s12, 1
      %s18 = ssub.s32 %s12, 2
      %s25 = sadd.s32 1, %s20
      %p26 = scmp.ge.s32.totalorder %s25, 4
      %s27 = scalar_select %p26, 0, %s25
      %s28 = sadd.s32 1, %s19
      %s29 = scalar_select %p26, %s28, %s19
      %p30 = scmp.ge.s32.totalorder %s29, 2
      %s31 = scalar_select %p30, 0, %s29
      %s32 = ssub.s32 %s19, %s31
      %p33 = scmp.eq.s32.totalorder %s32, 0
      %s35 = sadd.s32 %s34, 1
      %s36 = scalar_select %p33, %s34, %s35
      %p39 = pneg %p33
      %p40 = scmp.eq.s32.totalorder %s12, 7
      %p41 = por %p39, %p40
      %p42 = scmp.ne.s32.totalorder %s34, %s37
      %p43 = scmp.eq.s32.totalorder %s12, 0
      %p44 = por %p42, %p43
      %p45 = scmp.ne.s32.totalorder %s34, %s37
      %p46 = scmp.eq.s32.totalorder %s17, 7
      %p47 = por %p45, %p46
      %p48 = scmp.ne.s32.totalorder %s37, %s38
      %p49 = scmp.eq.s32.totalorder %s17, 0
      %p50 = por %p48, %p49
      %p51 = scmp.ne.s32.totalorder %s37, %s38
      %p52 = scmp.eq.s32.totalorder %s18, 7
      %p53 = por %p51, %p52
      %p55 = scmp.ne.s32.totalorder %s38, %s54
      %p56 = scmp.eq.s32.totalorder %s18, 0
      %p57 = por %p55, %p56
      %s59 = sadd.s32 %s58, 1
      %p62 = scmp.eq.s32.totalorder %s12, 7
      %p63 = scmp.ne.s32.totalorder %s58, %s60
      %p64 = scmp.eq.s32.totalorder %s12, 0
      %p65 = por %p63, %p64
      %p66 = scmp.ne.s32.totalorder %s58, %s60
      %p67 = scmp.eq.s32.totalorder %s17, 7
      %p68 = por %p66, %p67
      %p69 = scmp.ne.s32.totalorder %s60, %s61
      %p70 = scmp.eq.s32.totalorder %s17, 0
      %p71 = por %p69, %p70
      %p72 = scmp.ne.s32.totalorder %s60, %s61
      %p73 = scmp.eq.s32.totalorder %s18, 7
      %p74 = por %p72, %p73
      %p76 = scmp.ne.s32.totalorder %s61, %s75
      %p77 = scmp.eq.s32.totalorder %s18, 0
      %p78 = por %p76, %p77
      %s80 = sadd.s32 %s79, 1
      %p83 = scmp.eq.s32.totalorder %s12, 7
      %p84 = scmp.ne.s32.totalorder %s79, %s81
      %p85 = scmp.eq.s32.totalorder %s12, 0
      %p86 = por %p84, %p85
      %p87 = scmp.ne.s32.totalorder %s79, %s81
      %p88 = scmp.eq.s32.totalorder %s17, 7
      %p89 = por %p87, %p88
      %p90 = scmp.ne.s32.totalorder %s81, %s82
      %p91 = scmp.eq.s32.totalorder %s17, 0
      %p92 = por %p90, %p91
      %p93 = scmp.ne.s32.totalorder %s81, %s82
      %p94 = scmp.eq.s32.totalorder %s18, 7
      %p95 = por %p93, %p94
      %p97 = scmp.ne.s32.totalorder %s82, %s96
      %p98 = scmp.eq.s32.totalorder %s18, 0
      %p99 = por %p97, %p98
      %s100 = ssub.s32 %s19, %s31
      %p101 = scmp.eq.s32.totalorder %s100, 0
      %s103 = sadd.s32 %s102, 1
      %s104 = scalar_select %p101, %s102, %s103
      %p107 = pneg %p101
      %p108 = scmp.eq.s32.totalorder %s12, 7
      %p109 = por %p107, %p108
      %p110 = scmp.ne.s32.totalorder %s102, %s105
      %p111 = scmp.eq.s32.totalorder %s12, 0
      %p112 = por %p110, %p111
      %p113 = scmp.ne.s32.totalorder %s102, %s105
      %p114 = scmp.eq.s32.totalorder %s17, 7
      %p115 = por %p113, %p114
      %p116 = scmp.ne.s32.totalorder %s105, %s106
      %p117 = scmp.eq.s32.totalorder %s17, 0
      %p118 = por %p116, %p117
      %p119 = scmp.ne.s32.totalorder %s105, %s106
      %p120 = scmp.eq.s32.totalorder %s18, 7
      %p121 = por %p119, %p120
      %p123 = scmp.ne.s32.totalorder %s106, %s122
      %p124 = scmp.eq.s32.totalorder %s18, 0
      %p125 = por %p123, %p124
      %p126 = scmp.le.s32.totalorder 1, %s12
      %p127 = scmp.lt.s32.totalorder %s12, 9
      %p128 = pnand %p126, %p127
      %p129 = pneg %p128
      // Predicated region
      $region9: #{agt_stack.1} parent=5 // pred_check
        _
      $region10: #{agt_stack.1} parent=5 // pred_check_branch
        %131 = sbr.rel (%p128) target = $region12
      $region11: #{agt_stack.1} parent=5 // pred_region
        %s132 = ssub.s32 %s12, 1
        // Predicated region
        $region13: #{agt_stack.1} parent=11 // pred_check
          %p133 = pneg %p71
        $region14: #{agt_stack.1} parent=11 // pred_check_branch
          %135 = sbr.rel (%p133) target = $region16
        $region15: #{agt_stack.1} parent=11 // pred_region
          _
        $region16: #{agt_stack.1} parent=11 // pred_fallthru
          _
        // Predicated region
        $region17: #{agt_stack.1} parent=11 // pred_check
          %p136 = pneg %p92
        $region18: #{agt_stack.1} parent=11 // pred_check_branch
          %138 = sbr.rel (%p136) target = $region20
        $region19: #{agt_stack.1} parent=11 // pred_region
          _
        $region20: #{agt_stack.1} parent=11 // pred_fallthru
          _
      $region12: #{agt_stack.1} parent=5 // pred_fallthru
        _
      %p139 = scmp.lt.s32.totalorder %s12, 8
      // Predicated region
      $region21: #{agt_stack.1} parent=5 // pred_check
        %p140 = pneg %p139
      $region22: #{agt_stack.1} parent=5 // pred_check_branch
        %142 = sbr.rel (%p140) target = $region24
      $region23: #{agt_stack.1} parent=5 // pred_region
        // Predicated region
        $region25: #{agt_stack.1} parent=23 // pred_check
          %p143 = pneg %p44
        $region26: #{agt_stack.1} parent=23 // pred_check_branch
          %145 = sbr.rel (%p143) target = $region28
        $region27: #{agt_stack.1} parent=23 // pred_region
          %p146 = scmp.lt.s32.totalorder %s19, 1
          %s147 = scalar_select %p146, %s19, 1
          %s148 = smul.addr %s147, 2
          %s149 = smul.addr %s148, 8
          %s150 = scalar_lea.vmem %s0, %s149
        $region28: #{agt_stack.1} parent=23 // pred_fallthru
          _
      $region24: #{agt_stack.1} parent=5 // pred_fallthru
        _
      %p151 = scmp.le.s32.totalorder 1, %s12
      %p152 = scmp.lt.s32.totalorder %s12, 9
      %p153 = pnand %p151, %p152
      %p154 = pneg %p153
      // Predicated region
      $region29: #{agt_stack.1} parent=5 // pred_check
        _
      $region30: #{agt_stack.1} parent=5 // pred_check_branch
        %156 = sbr.rel (%p153) target = $region32
      $region31: #{agt_stack.1} parent=5 // pred_region
        %s157 = ssub.s32 %s12, 1
        %p158 = scmp.lt.s32.totalorder %s21, 1
        %s159 = scalar_select %p158, %s21, 1
        %s160 = smul.addr %s159, 2
        %s161 = smul.addr %s160, 8
        %s162 = scalar_lea.vmem %s0, %s161
        %p163 = pneg %p50
        %p164 = pneg %p47
        %p165 = pneg %p71
        %p166 = pneg %p68
        %p167 = pneg %p92
        %p168 = pneg %p89
        %p169 = pneg %p118
        %p170 = pneg %p115
        %s171 = sand.u32 %s105, 1
        %s172 = scalar_lea.sflag [#allocation4], %s171
        %s173 = sand.u32 %s105, 1
        %s174 = smul.addr %s173, 16
        %s175 = scalar_lea.vmem [#allocation3], %s174
        %p176 = scmp.lt.s32.totalorder %s21, 1
        %s177 = scalar_select %p176, %s21, 1
        %s178 = smul.addr %s177, 2
        %s179 = smul.addr %s178, 8
        %s180 = scalar_lea.vmem %s0, %s179
        %p181 = scmp.eq.s32.totalorder %s22, 0
        // Predicated region
        $region33: #{agt_stack.1} parent=31 // pred_check
          %p182 = pneg %p181
        $region34: #{agt_stack.1} parent=31 // pred_check_branch
          %184 = sbr.rel (%p182) target = $region36
        $region35: #{agt_stack.1} parent=31 // pred_region
          %v185 = vld [vmem:[%s180] sm:$0xff]
          %v186 = vld [vmem:[%s180 + $0x8] sm:$0xff]
          %vm187 = vcmask 261120
          %188 = vst.msk [vmem:[#allocation2] sm:$0xff] %vm187, %v185
          %189 = vst.msk [vmem:[#allocation2 + $0x8] sm:$0xff] %vm187, %v186
        $region36: #{agt_stack.1} parent=31 // pred_fallthru
          _
        %v190 = vld [vmem:[#allocation2] sm:$0xff]
        %v191 = vld [vmem:[#allocation2 + $0x8] sm:$0xff]
        %s192 = smul.u32 %s21, 4
        %s193 = sadd.s32 %s192, %s22
        %s194 = smul.u32 %s193, 104
        %s195 = scalar_lea.vmem %s1, %s194
        %v196 = vld [vmem:[%s195] sm:$0xff]
        %v197 = vld [vmem:[%s195 + $0x8] sm:$0xff]
        %v198 = vld [vmem:[%s195 + $0x10] sm:$0xff]
        %v199 = vld [vmem:[%s195 + $0x18] sm:$0xff]
        %v200 = vld [vmem:[%s195 + $0x20] sm:$0xff]
        %v201 = vld [vmem:[%s195 + $0x28] sm:$0xff]
        %v202 = vld [vmem:[%s195 + $0x30] sm:$0xff]
        %v203 = vld [vmem:[%s195 + $0x38] sm:$0xff]
        %v204 = vld [vmem:[%s195 + $0x40] sm:$0xff]
        %v205 = vld [vmem:[%s195 + $0x48] sm:$0xff]
        %v206 = vld [vmem:[%s195 + $0x50] sm:$0xff]
        %v207 = vld [vmem:[%s195 + $0x58] sm:$0xff]
        %v208 = vld [vmem:[%s195 + $0x60] sm:$0xff]
        %v209 = vld [vmem:[%s2] sm:$0xff]
        %v210 = vld [vmem:[%s2 + $0x8] sm:$0xff]
        %v211 = vld [vmem:[%s2 + $0x10] sm:$0xff]
        %v212 = vld [vmem:[%s2 + $0x18] sm:$0xff]
        %v213 = vld [vmem:[%s2 + $0x20] sm:$0xff]
        %v214 = vld [vmem:[%s2 + $0x28] sm:$0xff]
        %v215 = vld [vmem:[%s2 + $0x30] sm:$0xff]
        %v216 = vld [vmem:[%s2 + $0x38] sm:$0xff]
        %v217 = vld [vmem:[%s2 + $0x40] sm:$0xff]
        %v218 = vld [vmem:[%s2 + $0x48] sm:$0xff]
        %vm219 = vcmask 261120
        %v221 = vsel %vm219, %v190, 0
        %v224 = vsel %vm219, %v191, 0
        %226 = vmatprep.subr.mxu0 0.0
        %227 = vmatpush1.msra.mxu0 %v196
        %228 = vmatprep.subr.mxu0 0.0
        %229 = vmatpush1.msra.mxu0 %v197
        %230 = vmatprep.subr.mxu0 0.0
        %231 = vmatpush1.msra.mxu0 %v198
        %232 = vmatprep.subr.mxu0 0.0
        %233 = vmatpush1.msra.mxu0 %v199
        %234 = vmatprep.subr.mxu0 0.0
        %235 = vmatpush1.msra.mxu0 0.0
        %236 = vmatprep.subr.mxu0 0.0
        %237 = vmatpush1.msra.mxu0 0.0
        %238 = vmatprep.subr.mxu0 0.0
        %239 = vmatpush1.msra.mxu0 0.0
        %240 = vmatprep.subr.mxu0 0.0
        %241 = vmatpush1.msra.mxu0 0.0
        %242 = vmatprep.subr.mxu0 0.0
        %243 = vmatpush1.msra.mxu0 0.0
        %244 = vmatprep.subr.mxu0 0.0
        %245 = vmatpush1.msra.mxu0 0.0
        %246 = vmatprep.subr.mxu0 0.0
        %247 = vmatpush1.msra.mxu0 0.0
        %248 = vmatprep.subr.mxu0 0.0
        %249 = vmatpush1.msra.mxu0 0.0
        %250 = vmatprep.subr.mxu0 0.0
        %251 = vmatpush1.msra.mxu0 0.0
        %252 = vmatprep.subr.mxu0 0.0
        %253 = vmatpush1.msra.mxu0 0.0
        %254 = vmatprep.subr.mxu0 0.0
        %255 = vmatpush1.msra.mxu0 0.0
        %256 = vmatprep.subr.mxu0 0.0
        %257 = vmatpush1.msra.mxu0 0.0
        %258 = vmatprep.subr.mxu0 0.0
        %259 = vmatpush1.msra.mxu0 0.0
        %260 = vmatprep.subr.mxu0 0.0
        %261 = vmatpush1.msra.mxu0 0.0
        %262 = vmatprep.subr.mxu0 0.0
        %263 = vmatpush1.msra.mxu0 0.0
        %264 = vmatprep.subr.mxu0 0.0
        %265 = vmatpush1.msra.mxu0 0.0
        %266 = vmatprep.subr.mxu0 0.0
        %267 = vmatpush1.msra.mxu0 0.0
        %268 = vmatprep.subr.mxu0 0.0
        %269 = vmatpush1.msra.mxu0 0.0
        %270 = vmatprep.subr.mxu0 0.0
        %271 = vmatpush1.msra.mxu0 0.0
        %272 = vmatprep.subr.mxu0 0.0
        %273 = vmatpush1.msra.mxu0 0.0
        %274 = vmatprep.subr.mxu0 0.0
        %275 = vmatpush1.msra.mxu0 0.0
        %276 = vmatprep.subr.mxu0 0.0
        %277 = vmatpush1.msra.mxu0 0.0
        %278 = vmatprep.subr.mxu0 0.0
        %279 = vmatpush1.msra.mxu0 0.0
        %280 = vmatprep.subr.mxu0 0.0
        %281 = vmatpush1.msra.mxu0 0.0
        %282 = vmatprep.subr.mxu0 0.0
        %283 = vmatpush1.msra.mxu0 0.0
        %284 = vmatprep.subr.mxu0 0.0
        %285 = vmatpush1.msra.mxu0 0.0
        %286 = vmatprep.subr.mxu0 0.0
        %287 = vmatpush1.msra.mxu0 0.0
        %288 = vmatprep.subr.mxu0 0.0
        %289 = vmatpush1.msra.mxu0 0.0
        %290 = vmatprep.mubr.f32.mxu0 0.0
        %291 = vmatmul.mubr.f32.gmra.mrb[0].mxu0 %v221
        %v292 = vpop.f32.mrb[0].mxu0
        %v293 = vadd.f32 0.0, %v292
        %v294 = vpop.f32.mrb[0].mxu0
        %295 = vmatprep.mubr.f32.mxu0 0.0
        %296 = vmatmul.mubr.f32.gmra.mrb[0].mxu0 %v224
        %v297 = vpop.f32.mrb[0].mxu0
        %v298 = vadd.f32 0.0, %v297
        %v299 = vpop.f32.mrb[0].mxu0
        %300 = vdwg.mxu0
        %vm301 = vcmp.gt.f32.partialorder %v293, 0.0
        %vm302 = vcmp.gt.f32.partialorder %v298, 0.0
        %v303 = vmul.f32 %v293, 0.01
        %v304 = vmul.f32 %v298, 0.01
        %v305 = vsel %vm301, %v293, %v303
        %v306 = vsel %vm302, %v298, %v304
        %309 = vrot.lane.b32.xlu0 %v305, 96
        %v310 = vpop.permute.xlu0 %309
        %311 = vrot.lane.b32.xlu0 %v306, 96
        %v312 = vpop.permute.xlu0 %311
        %317 = vrot.lane.b32.xlu0 %v200, 96
        %v318 = vpop.permute.xlu0 %317
        %319 = vrot.lane.b32.xlu0 %v201, 96
        %v320 = vpop.permute.xlu0 %319
        %321 = vrot.lane.b32.xlu0 %v202, 96
        %v322 = vpop.permute.xlu0 %321
        %323 = vrot.lane.b32.xlu0 %v203, 96
        %v324 = vpop.permute.xlu0 %323
        %v329 = vsel %vm219, %v310, 0
        %v331 = vsel %vm219, %v312, 0
        %333 = vmatprep.subr.mxu0 0.0
        %334 = vmatpush1.msra.mxu0 %v318
        %335 = vmatprep.subr.mxu0 0.0
        %336 = vmatpush1.msra.mxu0 %v320
        %337 = vmatprep.subr.mxu0 0.0
        %338 = vmatpush1.msra.mxu0 %v322
        %339 = vmatprep.subr.mxu0 0.0
        %340 = vmatpush1.msra.mxu0 %v324
        %341 = vmatprep.subr.mxu0 0.0
        %342 = vmatpush1.msra.mxu0 0.0
        %343 = vmatprep.subr.mxu0 0.0
        %344 = vmatpush1.msra.mxu0 0.0
        %345 = vmatprep.subr.mxu0 0.0
        %346 = vmatpush1.msra.mxu0 0.0
        %347 = vmatprep.subr.mxu0 0.0
        %348 = vmatpush1.msra.mxu0 0.0
        %349 = vmatprep.subr.mxu0 0.0
        %350 = vmatpush1.msra.mxu0 0.0
        %351 = vmatprep.subr.mxu0 0.0
        %352 = vmatpush1.msra.mxu0 0.0
        %353 = vmatprep.subr.mxu0 0.0
        %354 = vmatpush1.msra.mxu0 0.0
        %355 = vmatprep.subr.mxu0 0.0
        %356 = vmatpush1.msra.mxu0 0.0
        %357 = vmatprep.subr.mxu0 0.0
        %358 = vmatpush1.msra.mxu0 0.0
        %359 = vmatprep.subr.mxu0 0.0
        %360 = vmatpush1.msra.mxu0 0.0
        %361 = vmatprep.subr.mxu0 0.0
        %362 = vmatpush1.msra.mxu0 0.0
        %363 = vmatprep.subr.mxu0 0.0
        %364 = vmatpush1.msra.mxu0 0.0
        %365 = vmatprep.subr.mxu0 0.0
        %366 = vmatpush1.msra.mxu0 0.0
        %367 = vmatprep.subr.mxu0 0.0
        %368 = vmatpush1.msra.mxu0 0.0
        %369 = vmatprep.subr.mxu0 0.0
        %370 = vmatpush1.msra.mxu0 0.0
        %371 = vmatprep.subr.mxu0 0.0
        %372 = vmatpush1.msra.mxu0 0.0
        %373 = vmatprep.subr.mxu0 0.0
        %374 = vmatpush1.msra.mxu0 0.0
        %375 = vmatprep.subr.mxu0 0.0
        %376 = vmatpush1.msra.mxu0 0.0
        %377 = vmatprep.subr.mxu0 0.0
        %378 = vmatpush1.msra.mxu0 0.0
        %379 = vmatprep.subr.mxu0 0.0
        %380 = vmatpush1.msra.mxu0 0.0
        %381 = vmatprep.subr.mxu0 0.0
        %382 = vmatpush1.msra.mxu0 0.0
        %383 = vmatprep.subr.mxu0 0.0
        %384 = vmatpush1.msra.mxu0 0.0
        %385 = vmatprep.subr.mxu0 0.0
        %386 = vmatpush1.msra.mxu0 0.0
        %387 = vmatprep.subr.mxu0 0.0
        %388 = vmatpush1.msra.mxu0 0.0
        %389 = vmatprep.subr.mxu0 0.0
        %390 = vmatpush1.msra.mxu0 0.0
        %391 = vmatprep.subr.mxu0 0.0
        %392 = vmatpush1.msra.mxu0 0.0
        %393 = vmatprep.subr.mxu0 0.0
        %394 = vmatpush1.msra.mxu0 0.0
        %395 = vmatprep.subr.mxu0 0.0
        %396 = vmatpush1.msra.mxu0 0.0
        %397 = vmatprep.mubr.f32.mxu0 0.0
        %398 = vmatmul.mubr.f32.gmra.mrb[0].mxu0 %v329
        %v399 = vpop.f32.mrb[0].mxu0
        %v400 = vadd.f32 0.0, %v399
        %v401 = vpop.f32.mrb[0].mxu0
        %402 = vmatprep.mubr.f32.mxu0 0.0
        %403 = vmatmul.mubr.f32.gmra.mrb[0].mxu0 %v331
        %v404 = vpop.f32.mrb[0].mxu0
        %v405 = vadd.f32 0.0, %v404
        %v406 = vpop.f32.mrb[0].mxu0
        %407 = vdwg.mxu0
        %408 = vxpose.xlu0.b32.start [1/16] %v400, 128
        %409 = vxpose.xlu0.b32.cont [2/16] %v405, 128
        %410 = vxpose.xlu0.b32.cont [3/16] 0.0, 128
        %411 = vxpose.xlu0.b32.cont [4/16] 0.0, 128
        %412 = vxpose.xlu0.b32.cont [5/16] 0.0, 128
        %413 = vxpose.xlu0.b32.cont [6/16] 0.0, 128
        %414 = vxpose.xlu0.b32.cont [7/16] 0.0, 128
        %415 = vxpose.xlu0.b32.cont [8/16] 0.0, 128
        %416 = vxpose.xlu0.b32.cont [9/16] 0.0, 128
        %417 = vxpose.xlu0.b32.cont [10/16] 0.0, 128
        %418 = vxpose.xlu0.b32.cont [11/16] 0.0, 128
        %419 = vxpose.xlu0.b32.cont [12/16] 0.0, 128
        %420 = vxpose.xlu0.b32.cont [13/16] 0.0, 128
        %421 = vxpose.xlu0.b32.cont [14/16] 0.0, 128
        %422 = vxpose.xlu0.b32.cont [15/16] 0.0, 128
        %423 = vxpose.xlu0.b32.end [16/16] 0.0, 128
        %v424 = vpop.trf.xlu0
        %v425 = vpop.trf.xlu0
        %v426 = vpop.trf.xlu0
        %v427 = vpop.trf.xlu0
        %v428 = vpop.trf.xlu0
        %v429 = vpop.trf.xlu0
        %v430 = vpop.trf.xlu0
        %v431 = vpop.trf.xlu0
        %v432 = vpop.trf.xlu0
        %v433 = vpop.trf.xlu0
        %v434 = vpop.trf.xlu0
        %v435 = vpop.trf.xlu0
        %v436 = vpop.trf.xlu0
        %v437 = vpop.trf.xlu0
        %v438 = vpop.trf.xlu0
        %v439 = vpop.trf.xlu0
        %v441 = vrot.slane %v424, 1
        %442 = vrot.lane.b32.xlu0 %v441, 16
        %v443 = vpop.permute.xlu0 %442
        %vm445 = vcmask 130048
        %v446 = vsel %vm445, %v424, %v443
        %v447 = vlaneseq
        %v448 = vshrl.u32 %v447, 7
        %v449 = vsub.s32 0, %v448
        %v450 = vrot.slane %v446, %v449
        %v451 = vsel %vm219, %v305, 0
        %v453 = vsel %vm219, %v306, 0
        %455 = vmatprep.subr.mxu0 0.0
        %456 = vmatpush1.msra.mxu0 %v200
        %457 = vmatprep.subr.mxu0 0.0
        %458 = vmatpush1.msra.mxu0 %v201
        %459 = vmatprep.subr.mxu0 0.0
        %460 = vmatpush1.msra.mxu0 %v202
        %461 = vmatprep.subr.mxu0 0.0
        %462 = vmatpush1.msra.mxu0 %v203
        %463 = vmatprep.subr.mxu0 0.0
        %464 = vmatpush1.msra.mxu0 0.0
        %465 = vmatprep.subr.mxu0 0.0
        %466 = vmatpush1.msra.mxu0 0.0
        %467 = vmatprep.subr.mxu0 0.0
        %468 = vmatpush1.msra.mxu0 0.0
        %469 = vmatprep.subr.mxu0 0.0
        %470 = vmatpush1.msra.mxu0 0.0
        %471 = vmatprep.subr.mxu0 0.0
        %472 = vmatpush1.msra.mxu0 0.0
        %473 = vmatprep.subr.mxu0 0.0
        %474 = vmatpush1.msra.mxu0 0.0
        %475 = vmatprep.subr.mxu0 0.0
        %476 = vmatpush1.msra.mxu0 0.0
        %477 = vmatprep.subr.mxu0 0.0
        %478 = vmatpush1.msra.mxu0 0.0
        %479 = vmatprep.subr.mxu0 0.0
        %480 = vmatpush1.msra.mxu0 0.0
        %481 = vmatprep.subr.mxu0 0.0
        %482 = vmatpush1.msra.mxu0 0.0
        %483 = vmatprep.subr.mxu0 0.0
        %484 = vmatpush1.msra.mxu0 0.0
        %485 = vmatprep.subr.mxu0 0.0
        %486 = vmatpush1.msra.mxu0 0.0
        %487 = vmatprep.subr.mxu0 0.0
        %488 = vmatpush1.msra.mxu0 0.0
        %489 = vmatprep.subr.mxu0 0.0
        %490 = vmatpush1.msra.mxu0 0.0
        %491 = vmatprep.subr.mxu0 0.0
        %492 = vmatpush1.msra.mxu0 0.0
        %493 = vmatprep.subr.mxu0 0.0
        %494 = vmatpush1.msra.mxu0 0.0
        %495 = vmatprep.subr.mxu0 0.0
        %496 = vmatpush1.msra.mxu0 0.0
        %497 = vmatprep.subr.mxu0 0.0
        %498 = vmatpush1.msra.mxu0 0.0
        %499 = vmatprep.subr.mxu0 0.0
        %500 = vmatpush1.msra.mxu0 0.0
        %501 = vmatprep.subr.mxu0 0.0
        %502 = vmatpush1.msra.mxu0 0.0
        %503 = vmatprep.subr.mxu0 0.0
        %504 = vmatpush1.msra.mxu0 0.0
        %505 = vmatprep.subr.mxu0 0.0
        %506 = vmatpush1.msra.mxu0 0.0
        %507 = vmatprep.subr.mxu0 0.0
        %508 = vmatpush1.msra.mxu0 0.0
        %509 = vmatprep.subr.mxu0 0.0
        %510 = vmatpush1.msra.mxu0 0.0
        %511 = vmatprep.subr.mxu0 0.0
        %512 = vmatpush1.msra.mxu0 0.0
        %513 = vmatprep.subr.mxu0 0.0
        %514 = vmatpush1.msra.mxu0 0.0
        %515 = vmatprep.subr.mxu0 0.0
        %516 = vmatpush1.msra.mxu0 0.0
        %517 = vmatprep.subr.mxu0 0.0
        %518 = vmatpush1.msra.mxu0 0.0
        %519 = vmatprep.mubr.f32.mxu0 0.0
        %520 = vmatmul.mubr.f32.gmra.mrb[0].mxu0 %v451
        %v521 = vpop.f32.mrb[0].mxu0
        %v522 = vadd.f32 %v450, %v521
        %v523 = vpop.f32.mrb[0].mxu0
        %524 = vmatprep.mubr.f32.mxu0 0.0
        %525 = vmatmul.mubr.f32.gmra.mrb[0].mxu0 %v453
        %v526 = vpop.f32.mrb[0].mxu0
        %v527 = vadd.f32 %v450, %v526
        %v528 = vpop.f32.mrb[0].mxu0
        %529 = vdwg.mxu0
        %v530 = vadd.f32 %v522, %v209
        %v531 = vadd.f32 %v527, %v210
        %v532 = vsel %vm445, %v530, -inf
        %533 = vmax.xlane.f32.xlu0 %v532
        %v534 = vpop.xlane.xlu0 %533
        %v535 = vsel %vm445, %v531, -inf
        %536 = vmax.xlane.f32.xlu0 %v535
        %v537 = vpop.xlane.xlu0 %536
        %vm538 = vcmask 261248
        %v539 = vsel %vm538, %v530, -inf
        %540 = vmax.xlane.f32.xlu0 %v539
        %v541 = vpop.xlane.xlu0 %540
        %v542 = vsel %vm538, %v531, -inf
        %543 = vmax.xlane.f32.xlu0 %v542
        %v544 = vpop.xlane.xlu0 %543
        %v545 = vsel %vm445, %v534, %v541
        %v546 = vsel %vm445, %v537, %v544
        %v547 = vsub.f32 %v530, %v545
        %v548 = vsub.f32 %v531, %v546
        %v549 = vmul.f32 %v547, 1.442695
        %v550 = vpow.pop %v549
        %v551 = vmul.f32 %v548, 1.442695
        %v552 = vpow.pop %v551
        %v554 = vsel %vm219, %v550, 0
        %v557 = vsel %vm219, %v552, 0
        %559 = vmatprep.subr.mxu0 0.0
        %560 = vmatpush1.msra.mxu0 %v211
        %561 = vmatprep.subr.mxu0 0.0
        %562 = vmatpush1.msra.mxu0 %v212
        %563 = vmatprep.subr.mxu0 0.0
        %564 = vmatpush1.msra.mxu0 %v213
        %565 = vmatprep.subr.mxu0 0.0
        %566 = vmatpush1.msra.mxu0 %v214
        %567 = vmatprep.subr.mxu0 0.0
        %568 = vmatpush1.msra.mxu0 0.0
        %569 = vmatprep.subr.mxu0 0.0
        %570 = vmatpush1.msra.mxu0 0.0
        %571 = vmatprep.subr.mxu0 0.0
        %572 = vmatpush1.msra.mxu0 0.0
        %573 = vmatprep.subr.mxu0 0.0
        %574 = vmatpush1.msra.mxu0 0.0
        %575 = vmatprep.subr.mxu0 0.0
        %576 = vmatpush1.msra.mxu0 0.0
        %577 = vmatprep.subr.mxu0 0.0
        %578 = vmatpush1.msra.mxu0 0.0
        %579 = vmatprep.subr.mxu0 0.0
        %580 = vmatpush1.msra.mxu0 0.0
        %581 = vmatprep.subr.mxu0 0.0
        %582 = vmatpush1.msra.mxu0 0.0
        %583 = vmatprep.subr.mxu0 0.0
        %584 = vmatpush1.msra.mxu0 0.0
        %585 = vmatprep.subr.mxu0 0.0
        %586 = vmatpush1.msra.mxu0 0.0
        %587 = vmatprep.subr.mxu0 0.0
        %588 = vmatpush1.msra.mxu0 0.0
        %589 = vmatprep.subr.mxu0 0.0
        %590 = vmatpush1.msra.mxu0 0.0
        %591 = vmatprep.subr.mxu0 0.0
        %592 = vmatpush1.msra.mxu0 0.0
        %593 = vmatprep.subr.mxu0 0.0
        %594 = vmatpush1.msra.mxu0 0.0
        %595 = vmatprep.subr.mxu0 0.0
        %596 = vmatpush1.msra.mxu0 0.0
        %597 = vmatprep.subr.mxu0 0.0
        %598 = vmatpush1.msra.mxu0 0.0
        %599 = vmatprep.subr.mxu0 0.0
        %600 = vmatpush1.msra.mxu0 0.0
        %601 = vmatprep.subr.mxu0 0.0
        %602 = vmatpush1.msra.mxu0 0.0
        %603 = vmatprep.subr.mxu0 0.0
        %604 = vmatpush1.msra.mxu0 0.0
        %605 = vmatprep.subr.mxu0 0.0
        %606 = vmatpush1.msra.mxu0 0.0
        %607 = vmatprep.subr.mxu0 0.0
        %608 = vmatpush1.msra.mxu0 0.0
        %609 = vmatprep.subr.mxu0 0.0
        %610 = vmatpush1.msra.mxu0 0.0
        %611 = vmatprep.subr.mxu0 0.0
        %612 = vmatpush1.msra.mxu0 0.0
        %613 = vmatprep.subr.mxu0 0.0
        %614 = vmatpush1.msra.mxu0 0.0
        %615 = vmatprep.subr.mxu0 0.0
        %616 = vmatpush1.msra.mxu0 0.0
        %617 = vmatprep.subr.mxu0 0.0
        %618 = vmatpush1.msra.mxu0 0.0
        %619 = vmatprep.subr.mxu0 0.0
        %620 = vmatpush1.msra.mxu0 0.0
        %621 = vmatprep.subr.mxu0 0.0
        %622 = vmatpush1.msra.mxu0 0.0
        %623 = vmatprep.mubr.f32.mxu0 0.0
        %624 = vmatmul.mubr.f32.gmra.mrb[0].mxu0 %v554
        %v625 = vpop.f32.mrb[0].mxu0
        %v626 = vadd.f32 0.0, %v625
        %v627 = vpop.f32.mrb[0].mxu0
        %628 = vmatprep.mubr.f32.mxu0 0.0
        %629 = vmatmul.mubr.f32.gmra.mrb[0].mxu0 %v557
        %v630 = vpop.f32.mrb[0].mxu0
        %v631 = vadd.f32 0.0, %v630
        %v632 = vpop.f32.mrb[0].mxu0
        %633 = vdwg.mxu0
        %v634 = vrcp.pop %v626
        %v635 = vrcp.pop %v631
        %v636 = vmul.f32 %v550, %v634
        %v637 = vmul.f32 %v552, %v635
        %642 = vrot.lane.b32.xlu0 %v215, 32
        %v643 = vpop.permute.xlu0 %642
        %644 = vrot.lane.b32.xlu0 %v216, 32
        %v645 = vpop.permute.xlu0 %644
        %646 = vrot.lane.b32.xlu0 %v217, 32
        %v647 = vpop.permute.xlu0 %646
        %648 = vrot.lane.b32.xlu0 %v218, 32
        %v649 = vpop.permute.xlu0 %648
        %v654 = vmul.f32 %v293, %v643
        %v655 = vmul.f32 %v298, %v645
        %v656 = vmul.f32 %v293, %v647
        %v657 = vmul.f32 %v298, %v649
        %662 = vrot.lane.b32.xlu0 %v654, 96
        %v663 = vpop.permute.xlu0 %662
        %664 = vrot.lane.b32.xlu0 %v655, 96
        %v665 = vpop.permute.xlu0 %664
        %666 = vrot.lane.b32.xlu0 %v656, 96
        %v667 = vpop.permute.xlu0 %666
        %668 = vrot.lane.b32.xlu0 %v657, 96
        %v669 = vpop.permute.xlu0 %668
        %v675 = vsel %vm219, %v636, 0
        %v678 = vsel %vm219, %v637, 0
        %680 = vmatprep.subr.mxu0 0.0
        %681 = vmatpush1.msra.mxu0 %v663
        %682 = vmatprep.subr.mxu0 0.0
        %683 = vmatpush1.msra.mxu0 %v665
        %684 = vmatprep.subr.mxu0 0.0
        %685 = vmatpush1.msra.mxu0 %v667
        %686 = vmatprep.subr.mxu0 0.0
        %687 = vmatpush1.msra.mxu0 %v669
        %688 = vmatprep.subr.mxu0 0.0
        %689 = vmatpush1.msra.mxu0 0.0
        %690 = vmatprep.subr.mxu0 0.0
        %691 = vmatpush1.msra.mxu0 0.0
        %692 = vmatprep.subr.mxu0 0.0
        %693 = vmatpush1.msra.mxu0 0.0
        %694 = vmatprep.subr.mxu0 0.0
        %695 = vmatpush1.msra.mxu0 0.0
        %696 = vmatprep.subr.mxu0 0.0
        %697 = vmatpush1.msra.mxu0 0.0
        %698 = vmatprep.subr.mxu0 0.0
        %699 = vmatpush1.msra.mxu0 0.0
        %700 = vmatprep.subr.mxu0 0.0
        %701 = vmatpush1.msra.mxu0 0.0
        %702 = vmatprep.subr.mxu0 0.0
        %703 = vmatpush1.msra.mxu0 0.0
        %704 = vmatprep.subr.mxu0 0.0
        %705 = vmatpush1.msra.mxu0 0.0
        %706 = vmatprep.subr.mxu0 0.0
        %707 = vmatpush1.msra.mxu0 0.0
        %708 = vmatprep.subr.mxu0 0.0
        %709 = vmatpush1.msra.mxu0 0.0
        %710 = vmatprep.subr.mxu0 0.0
        %711 = vmatpush1.msra.mxu0 0.0
        %712 = vmatprep.subr.mxu0 0.0
        %713 = vmatpush1.msra.mxu0 0.0
        %714 = vmatprep.subr.mxu0 0.0
        %715 = vmatpush1.msra.mxu0 0.0
        %716 = vmatprep.subr.mxu0 0.0
        %717 = vmatpush1.msra.mxu0 0.0
        %718 = vmatprep.subr.mxu0 0.0
        %719 = vmatpush1.msra.mxu0 0.0
        %720 = vmatprep.subr.mxu0 0.0
        %721 = vmatpush1.msra.mxu0 0.0
        %722 = vmatprep.subr.mxu0 0.0
        %723 = vmatpush1.msra.mxu0 0.0
        %724 = vmatprep.subr.mxu0 0.0
        %725 = vmatpush1.msra.mxu0 0.0
        %726 = vmatprep.subr.mxu0 0.0
        %727 = vmatpush1.msra.mxu0 0.0
        %728 = vmatprep.subr.mxu0 0.0
        %729 = vmatpush1.msra.mxu0 0.0
        %730 = vmatprep.subr.mxu0 0.0
        %731 = vmatpush1.msra.mxu0 0.0
        %732 = vmatprep.subr.mxu0 0.0
        %733 = vmatpush1.msra.mxu0 0.0
        %734 = vmatprep.subr.mxu0 0.0
        %735 = vmatpush1.msra.mxu0 0.0
        %736 = vmatprep.subr.mxu0 0.0
        %737 = vmatpush1.msra.mxu0 0.0
        %738 = vmatprep.subr.mxu0 0.0
        %739 = vmatpush1.msra.mxu0 0.0
        %740 = vmatprep.subr.mxu0 0.0
        %741 = vmatpush1.msra.mxu0 0.0
        %742 = vmatprep.subr.mxu0 0.0
        %743 = vmatpush1.msra.mxu0 0.0
        %744 = vmatprep.mubr.f32.mxu0 0.0
        %745 = vmatmul.mubr.f32.gmra.mrb[0].mxu0 %v675
        %v746 = vpop.f32.mrb[0].mxu0
        %v747 = vadd.f32 0.0, %v746
        %v748 = vpop.f32.mrb[0].mxu0
        %749 = vmatprep.mubr.f32.mxu0 0.0
        %750 = vmatmul.mubr.f32.gmra.mrb[0].mxu0 %v678
        %v751 = vpop.f32.mrb[0].mxu0
        %v752 = vadd.f32 0.0, %v751
        %v753 = vpop.f32.mrb[0].mxu0
        %754 = vdwg.mxu0
        %v756 = vsel %vm219, %v747, 0
        %v759 = vsel %vm219, %v752, 0
        %761 = vmatprep.subr.mxu0 0.0
        %762 = vmatpush1.msra.mxu0 %v204
        %763 = vmatprep.subr.mxu0 0.0
        %764 = vmatpush1.msra.mxu0 %v205
        %765 = vmatprep.subr.mxu0 0.0
        %766 = vmatpush1.msra.mxu0 %v206
        %767 = vmatprep.subr.mxu0 0.0
        %768 = vmatpush1.msra.mxu0 %v207
        %769 = vmatprep.subr.mxu0 0.0
        %770 = vmatpush1.msra.mxu0 0.0
        %771 = vmatprep.subr.mxu0 0.0
        %772 = vmatpush1.msra.mxu0 0.0
        %773 = vmatprep.subr.mxu0 0.0
        %774 = vmatpush1.msra.mxu0 0.0
        %775 = vmatprep.subr.mxu0 0.0
        %776 = vmatpush1.msra.mxu0 0.0
        %777 = vmatprep.subr.mxu0 0.0
        %778 = vmatpush1.msra.mxu0 0.0
        %779 = vmatprep.subr.mxu0 0.0
        %780 = vmatpush1.msra.mxu0 0.0
        %781 = vmatprep.subr.mxu0 0.0
        %782 = vmatpush1.msra.mxu0 0.0
        %783 = vmatprep.subr.mxu0 0.0
        %784 = vmatpush1.msra.mxu0 0.0
        %785 = vmatprep.subr.mxu0 0.0
        %786 = vmatpush1.msra.mxu0 0.0
        %787 = vmatprep.subr.mxu0 0.0
        %788 = vmatpush1.msra.mxu0 0.0
        %789 = vmatprep.subr.mxu0 0.0
        %790 = vmatpush1.msra.mxu0 0.0
        %791 = vmatprep.subr.mxu0 0.0
        %792 = vmatpush1.msra.mxu0 0.0
        %793 = vmatprep.subr.mxu0 0.0
        %794 = vmatpush1.msra.mxu0 0.0
        %795 = vmatprep.subr.mxu0 0.0
        %796 = vmatpush1.msra.mxu0 0.0
        %797 = vmatprep.subr.mxu0 0.0
        %798 = vmatpush1.msra.mxu0 0.0
        %799 = vmatprep.subr.mxu0 0.0
        %800 = vmatpush1.msra.mxu0 0.0
        %801 = vmatprep.subr.mxu0 0.0
        %802 = vmatpush1.msra.mxu0 0.0
        %803 = vmatprep.subr.mxu0 0.0
        %804 = vmatpush1.msra.mxu0 0.0
        %805 = vmatprep.subr.mxu0 0.0
        %806 = vmatpush1.msra.mxu0 0.0
        %807 = vmatprep.subr.mxu0 0.0
        %808 = vmatpush1.msra.mxu0 0.0
        %809 = vmatprep.subr.mxu0 0.0
        %810 = vmatpush1.msra.mxu0 0.0
        %811 = vmatprep.subr.mxu0 0.0
        %812 = vmatpush1.msra.mxu0 0.0
        %813 = vmatprep.subr.mxu0 0.0
        %814 = vmatpush1.msra.mxu0 0.0
        %815 = vmatprep.subr.mxu0 0.0
        %816 = vmatpush1.msra.mxu0 0.0
        %817 = vmatprep.subr.mxu0 0.0
        %818 = vmatpush1.msra.mxu0 0.0
        %819 = vmatprep.subr.mxu0 0.0
        %820 = vmatpush1.msra.mxu0 0.0
        %821 = vmatprep.subr.mxu0 0.0
        %822 = vmatpush1.msra.mxu0 0.0
        %823 = vmatprep.subr.mxu0 0.0
        %824 = vmatpush1.msra.mxu0 0.0
        %825 = vmatprep.mubr.f32.mxu0 0.0
        %826 = vmatmul.mubr.f32.gmra.mrb[0].mxu0 %v756
        %v827 = vpop.f32.mrb[0].mxu0
        %v828 = vadd.f32 0.0, %v827
        %v829 = vpop.f32.mrb[0].mxu0
        %830 = vmatprep.mubr.f32.mxu0 0.0
        %831 = vmatmul.mubr.f32.gmra.mrb[0].mxu0 %v759
        %v832 = vpop.f32.mrb[0].mxu0
        %v833 = vadd.f32 0.0, %v832
        %v834 = vpop.f32.mrb[0].mxu0
        %835 = vdwg.mxu0
        %v836 = vadd.f32 %v190, %v828
        %v837 = vadd.f32 %v191, %v833
        %v838 = vsel %vm219, %v836, 0.0
        %839 = vadd.xlane.f32.xlu0 %v838
        %v840 = vpop.xlane.xlu0 %839
        %v841 = vsel %vm219, %v837, 0.0
        %842 = vadd.xlane.f32.xlu0 %v841
        %v843 = vpop.xlane.xlu0 %842
        %v844 = vrcp.pop 32.0
        %v845 = vmul.f32 %v840, %v844
        %v846 = vmul.f32 %v843, %v844
        %v847 = vmul.f32 %v836, %v836
        %v848 = vmul.f32 %v837, %v837
        %v849 = vsel %vm219, %v847, 0.0
        %850 = vadd.xlane.f32.xlu0 %v849
        %v851 = vpop.xlane.xlu0 %850
        %v852 = vsel %vm219, %v848, 0.0
        %853 = vadd.xlane.f32.xlu0 %v852
        %v854 = vpop.xlane.xlu0 %853
        %v855 = vmul.f32 %v851, %v844
        %v856 = vmul.f32 %v854, %v844
        %v857 = vmul.f32 %v845, %v845
        %v858 = vmul.f32 %v846, %v846
        %v859 = vsub.f32 %v855, %v857
        %v860 = vsub.f32 %v856, %v858
        %v861 = vsub.f32 %v836, %v845
        %v862 = vsub.f32 %v837, %v846
        %v863 = vadd.f32 %v859, 1e-05
        %v864 = vadd.f32 %v860, 1e-05
        %v865 = vrsqrt.pop %v863
        %v866 = vrsqrt.pop %v864
        %v867 = vmul.f32 %v861, %v865
        %v868 = vmul.f32 %v862, %v866
        %v869 = vlaneseq
        %v870 = vshrl.u32 %v869, 7
        %v871 = vsub.s32 0, %v870
        %v872 = vrot.slane %v208, %v871
        %v873 = vmul.f32 %v867, %v872
        %v874 = vmul.f32 %v868, %v872
        %v875 = vlaneseq
        %v876 = vshrl.u32 %v875, 7
        %v877 = vsub.s32 1, %v876
        %v878 = vrot.slane %v208, %v877
        %v879 = vadd.f32 %v873, %v878
        %v880 = vadd.f32 %v874, %v878
        %881 = vst.msk [vmem:[#allocation2] sm:$0xff] %vm219, %v879
        %882 = vst.msk [vmem:[#allocation2 + $0x8] sm:$0xff] %vm219, %v880
        %p883 = scmp.eq.s32.totalorder %s22, 3
        // Predicated region
        $region37: #{agt_stack.1} parent=31 // pred_check
          %p884 = pneg %p883
        $region38: #{agt_stack.1} parent=31 // pred_check_branch
          %886 = sbr.rel (%p884) target = $region40
        $region39: #{agt_stack.1} parent=31 // pred_region
          %887 = vst.msk [vmem:[%s175] sm:$0xff] %vm219, %v879
          %888 = vst.msk [vmem:[%s175 + $0x8] sm:$0xff] %vm219, %v880
        $region40: #{agt_stack.1} parent=31 // pred_fallthru
          _
        %s889 = sand.u32 %s105, 1
        %s890 = scalar_lea.sflag [#allocation4], %s889
        %s891 = sand.u32 %s105, 1
        %s892 = smul.addr %s891, 16
        %s893 = scalar_lea.vmem [#allocation3], %s892
        // Predicated region
        $region41: #{agt_stack.1} parent=31 // pred_check
          %p894 = pneg %p115
        $region42: #{agt_stack.1} parent=31 // pred_check_branch
          %896 = sbr.rel (%p894) target = $region44
        $region43: #{agt_stack.1} parent=31 // pred_region
          %s898 = ssub.s32 256, 256
          %899 = vsyncadd %s890, %s898
          %s900 = smul.addr %s21, 2
          %s901 = smul.addr %s900, 128
          %s902 = scalar_lea.hbm %s3, %s901
          %s903 = sshll.u32 %s893, 4
          %s904 = int_to_ptr.vmem [resolvable:$true] %s903
          %909 = dma.vmem_to_hbm [thread:$0]  %s904, 256, %s902, %s890, 128, 128, 8
        $region44: #{agt_stack.1} parent=31 // pred_fallthru
          _
      $region32: #{agt_stack.1} parent=5 // pred_fallthru
        _
      %p910 = scmp.le.s32.totalorder 2, %s12
      // Predicated region
      $region45: #{agt_stack.1} parent=5 // pred_check
        %p911 = pneg %p910
      $region46: #{agt_stack.1} parent=5 // pred_check_branch
        %913 = sbr.rel (%p911) target = $region48
      $region47: #{agt_stack.1} parent=5 // pred_region
        %s914 = ssub.s32 %s12, 2
        // Predicated region
        $region49: #{agt_stack.1} parent=47 // pred_check
          %p915 = pneg %p121
        $region50: #{agt_stack.1} parent=47 // pred_check_branch
          %917 = sbr.rel (%p915) target = $region52
        $region51: #{agt_stack.1} parent=47 // pred_region
          %s918 = sand.u32 %s106, 1
          %s919 = scalar_lea.sflag [#allocation4], %s918
          %s920 = sand.u32 %s106, 1
          %s921 = smul.addr %s920, 16
          %s922 = scalar_lea.vmem [#allocation3], %s921
          %923 = dma.done %s919, 256
        $region52: #{agt_stack.1} parent=47 // pred_fallthru
          _
      $region48: #{agt_stack.1} parent=5 // pred_fallthru
        _
    $region6: #{agt_stack.1} parent=1 // loop_footer
      %s16 = sadd.s32 1, %s12
    $region7: #{agt_stack.1} parent=1 // loop_footer_branch
      %11 = sbr.rel target = $region3
    $region8: #{agt_stack.1} parent=1 // loop_exit
      _
    %924 = vsyncpa [#allocation4], 1
    %s925 = scalar_lea.sflag [#allocation4], 1
    %926 = vsyncpa %s925, 1

</llo_original>
